<compile_context>
chip_gen: v7x
topology: tpu7x:2x2x1
jax: 0.10.0
libtpu: 0.0.40
codegen_flags: <defaults>
</compile_context>

<pallas_src>
import functools

import jax
import jax.numpy as jnp
from jax.experimental import pallas as pl
from jax.experimental.pallas import tpu as pltpu

# approxMatch level schedule: i in range(7, -3, -1), level = -4**i, except
# i == -2 where level = 0.  The 9 negative levels run in a fori_loop (level is
# carried and multiplied by 0.25 each step); the level == 0 step is special-
# cased after the loop as a rank-1 update.
_NUM_NEG_LEVELS = 9
_FIRST_LEVEL = -float(4.0 ** 7)


def _emd_kernel(x_ref, y_ref, out_ref, *, n, m, factorl, factorr):
    x = x_ref[0].astype(jnp.float32)   # (n, 3): point coords as sublane columns
    y = y_ref[0].astype(jnp.float32)   # (3, m): point coords as lane rows

    # Pairwise Euclidean distances (== torch.cdist).  x[:, k:k+1] is already an
    # (n, 1) sublane column and y[k:k+1, :] a (1, m) lane row -> no relayouts.
    d2 = jnp.zeros((n, m), dtype=jnp.float32)
    for k in range(3):
        diff = x[:, k:k + 1] - y[k:k + 1, :]
        d2 = d2 + diff * diff
    dist = jnp.sqrt(d2)                # (n, m), kept resident across all levels

    satl0 = jnp.full((n, 1), factorl, dtype=jnp.float32)
    satr0 = jnp.full((1, m), factorr, dtype=jnp.float32)
    cost0 = jnp.zeros((n, 1), dtype=jnp.float32)
    level0 = jnp.full((1, 1), _FIRST_LEVEL, dtype=jnp.float32)

    def level_body(_, carry):
        satl, satr, cost_rows, level = carry
        # EUP-bound exp; recomputing dist*dist per level is free VPU filler and
        # avoids keeping a second N x M buffer (d2) live across the loop.
        w = jnp.exp(level * (dist * dist)) * satr                      # (n, m)
        s = jnp.maximum(jnp.sum(w, axis=1, keepdims=True), 1e-9)       # (n, 1)
        w = w * (satl / s)          # exact n-element divide, N x M VPU multiply
        c0 = jnp.sum(w, axis=0, keepdims=True)                         # (1, m)
        col_scale = jnp.minimum(satr / jnp.maximum(c0 + 1e-9, 1e-9), 1.0)
        w = w * col_scale
        colsum = col_scale * c0               # == sum(w, axis=0) after scaling
        # matchCost contribution of this level (no persistent match matrix).
        cost_rows = cost_rows + jnp.sum(dist * w, axis=1, keepdims=True)
        # The PyTorch code subtracts the *column* sum from saturatedl as well
        # (index-consistent only for n == m, asserted wrapper-side).
        satl = jnp.maximum(satl - jnp.transpose(colsum), 0.0)
        satr = jnp.maximum(satr - colsum, 0.0)
        return satl, satr, cost_rows, level * 0.25

    satl, satr, cost_rows, _ = jax.lax.fori_loop(
        0, _NUM_NEG_LEVELS, level_body, (satl0, satr0, cost0, level0))

    # Final level (i == -2): level == 0, exp(0) == 1, so the pre-normalization
    # weights are rank-1 (satl_i * satr_j / sum(satr)).  Skip the N x M exp and
    # derive this level's cost from one N x M multiply-reduce.
    S = jnp.maximum(jnp.sum(satr, keepdims=True), 1e-9)                # (1, 1)
    L = jnp.sum(satl, keepdims=True)                                   # (1, 1)
    c0 = satr * (L / S)                                                # (1, m)
    col_scale = jnp.minimum(satr / jnp.maximum(c0 + 1e-9, 1e-9), 1.0)  # (1, m)
    v = satr * col_scale                                               # (1, m)
    row_dot = jnp.sum(dist * v, axis=1, keepdims=True)                 # (n, 1)
    cost_rows = cost_rows + (satl / S) * row_dot

    out_ref[0, 0, 0] = jnp.sum(cost_rows)


def _vmem_limit_bytes(n, m):
    """Analytic VMEM request: resident dist + one live w buffer + one temp per
    level iteration (the fori_loop bounds liveness), plus double-buffered input
    tiles ((n,3) pads to 128 lanes, (3,m) pads to 8 sublanes) and headroom."""
    nm = n * m * 4
    need = 3 * nm + 2 * (n * 128 * 4) + 2 * (8 * m * 4) + (4 << 20)
    try:
        cap = int(pltpu.get_tpu_info().vmem_capacity_bytes) - (4 << 20)
    except Exception:
        cap = None                 # don't clamp (e.g. AOT / query unavailable)
    if cap is not None:
        need = min(need, cap)
    return int(max(need, 16 << 20))


def emd_loss(X, Y):
    """X, Y: (B, N, 3). Returns the scalar mean EMD (approxMatch + matchCost)."""
    B, n, _ = X.shape
    m = Y.shape[1]
    assert n == m, "original EMD code is only well-defined for n == m"
    factorl = float(max(n, m)) / n
    factorr = float(max(n, m)) / m

    Xf = X.astype(jnp.float32)                              # (B, n, 3)
    Yt = jnp.transpose(Y.astype(jnp.float32), (0, 2, 1))    # (B, 3, m) lane-dense

    kernel = functools.partial(
        _emd_kernel, n=n, m=m, factorl=factorl, factorr=factorr)

    per_batch = pl.pallas_call(
        kernel,
        out_shape=jax.ShapeDtypeStruct((B, 1, 1), jnp.float32),
        grid_spec=pltpu.PrefetchScalarGridSpec(
            num_scalar_prefetch=0,
            grid=(B,),
            in_specs=[
                pl.BlockSpec((1, n, 3), lambda b: (b, 0, 0)),
                pl.BlockSpec((1, 3, m), lambda b: (b, 0, 0)),
            ],
            out_specs=pl.BlockSpec((1, 1, 1), lambda b: (b, 0, 0),
                                   memory_space=pltpu.MemorySpace.SMEM),
        ),
        compiler_params=pltpu.CompilerParams(
            dimension_semantics=("parallel",),
            vmem_limit_bytes=_vmem_limit_bytes(n, m),
        ),
    )(Xf, Yt)

    return jnp.mean(per_batch)


def _emd_reference(X, Y):
    """Pure-JAX port of the PyTorch approxMatch/matchCost (for validation)."""
    def one(Xb, Yb):
        n, m = Xb.shape[0], Yb.shape[0]
        factorl = float(max(n, m)) / n
        factorr = float(max(n, m)) / m
        d = jnp.sqrt(jnp.sum((Xb[:, None, :] - Yb[None, :, :]) ** 2, axis=-1))
        satl = jnp.full((n,), factorl, jnp.float32)
        satr = jnp.full((m,), factorr, jnp.float32)
        match = jnp.zeros((n, m), jnp.float32)
        for i in range(7, -3, -1):
            level = 0.0 if i == -2 else -(4.0 ** i)
            w = jnp.exp(level * d * d) * satr[None, :]
            s = jnp.maximum(jnp.sum(w, axis=1), 1e-9)
            w = w / s[:, None] * satl[:, None]
            ss = jnp.maximum(1e-9 + jnp.sum(w, axis=0), 1e-9)
            ss = jnp.minimum(satr / ss, 1.0)
            w = w * ss[None, :]
            colsum = jnp.sum(w, axis=0)
            satl = jnp.maximum(satl - colsum, 0.0)
            match = match + w
            satr = jnp.maximum(satr - colsum, 0.0)
        return jnp.sum(d * match)
    return jnp.mean(jax.vmap(one)(X, Y))


if __name__ == "__main__":
    key = jax.random.PRNGKey(0)
    kx, ky = jax.random.split(key)
    B, N = 2, 128  # small stand-in for the (B, 2048, 3) production shape
    X = jax.random.normal(kx, (B, N, 3), dtype=jnp.float32)
    Y = jax.random.normal(ky, (B, N, 3), dtype=jnp.float32)

    loss = emd_loss(X, Y)
    jax.block_until_ready(loss)

    ref = _emd_reference(X, Y)
    assert jnp.isfinite(loss)
    assert jnp.allclose(loss, ref, rtol=2e-3, atol=5e-2), (float(loss), float(ref))
    print("KERNEL_OK")
</pallas_src>

<mosaic_0001>
module attributes {stable_mosaic.version = 11 : i64} {
  func.func @_emd_kernel(%arg0: i32, %arg1: memref<1x128x3xf32, #tpu.memory_space<vmem>>, %arg2: memref<1x3x128xf32, #tpu.memory_space<vmem>>, %arg3: memref<1x1x1xf32, #tpu.memory_space<smem>>) attributes {dimension_semantics = [#tpu.dimension_semantics<parallel>], iteration_bounds = array<i64: 2>, scalar_prefetch = 0 : i64, scratch_operands = 0 : i64, tpu.core_type = #tpu.core_type<tc>, window_params = [{transform_indices = @transform_0, window_bounds = array<i64: 1, 128, 3>}, {transform_indices = @transform_1, window_bounds = array<i64: 1, 3, 128>}, {transform_indices = @transform_2, window_bounds = array<i64: 1, 1, 1>}]} {
    %c0 = arith.constant 0 : index
    %c0_0 = arith.constant 0 : index
    %c0_1 = arith.constant 0 : index
    %0 = vector.load %arg1[%c0, %c0_0, %c0_1] : memref<1x128x3xf32, #tpu.memory_space<vmem>>, vector<1x128x3xf32>
    %1 = vector.shape_cast %0 : vector<1x128x3xf32> to vector<128x3xf32>
    %c0_2 = arith.constant 0 : index
    %c0_3 = arith.constant 0 : index
    %c0_4 = arith.constant 0 : index
    %2 = vector.load %arg2[%c0_2, %c0_3, %c0_4] : memref<1x3x128xf32, #tpu.memory_space<vmem>>, vector<1x3x128xf32>
    %3 = vector.shape_cast %2 : vector<1x3x128xf32> to vector<3x128xf32>
    %cst = arith.constant 0.000000e+00 : f32
    %4 = vector.broadcast %cst : f32 to vector<128x128xf32>
    %5 = vector.extract_strided_slice %1 {offsets = [0, 0], sizes = [128, 1], strides = [1, 1]} : vector<128x3xf32> to vector<128x1xf32>
    %6 = vector.extract_strided_slice %3 {offsets = [0, 0], sizes = [1, 128], strides = [1, 1]} : vector<3x128xf32> to vector<1x128xf32>
    %7 = vector.broadcast %5 : vector<128x1xf32> to vector<128x128xf32>
    %8 = vector.broadcast %6 : vector<1x128xf32> to vector<128x128xf32>
    %9 = arith.subf %7, %8 : vector<128x128xf32>
    %10 = arith.mulf %9, %9 : vector<128x128xf32>
    %11 = arith.addf %4, %10 : vector<128x128xf32>
    %12 = vector.extract_strided_slice %1 {offsets = [0, 1], sizes = [128, 1], strides = [1, 1]} : vector<128x3xf32> to vector<128x1xf32>
    %13 = vector.extract_strided_slice %3 {offsets = [1, 0], sizes = [1, 128], strides = [1, 1]} : vector<3x128xf32> to vector<1x128xf32>
    %14 = vector.broadcast %12 : vector<128x1xf32> to vector<128x128xf32>
    %15 = vector.broadcast %13 : vector<1x128xf32> to vector<128x128xf32>
    %16 = arith.subf %14, %15 : vector<128x128xf32>
    %17 = arith.mulf %16, %16 : vector<128x128xf32>
    %18 = arith.addf %11, %17 : vector<128x128xf32>
    %19 = vector.extract_strided_slice %1 {offsets = [0, 2], sizes = [128, 1], strides = [1, 1]} : vector<128x3xf32> to vector<128x1xf32>
    %20 = vector.extract_strided_slice %3 {offsets = [2, 0], sizes = [1, 128], strides = [1, 1]} : vector<3x128xf32> to vector<1x128xf32>
    %21 = vector.broadcast %19 : vector<128x1xf32> to vector<128x128xf32>
    %22 = vector.broadcast %20 : vector<1x128xf32> to vector<128x128xf32>
    %23 = arith.subf %21, %22 : vector<128x128xf32>
    %24 = arith.mulf %23, %23 : vector<128x128xf32>
    %25 = arith.addf %18, %24 : vector<128x128xf32>
    %26 = math.sqrt %25 : vector<128x128xf32>
    %cst_5 = arith.constant 1.000000e+00 : f32
    %27 = vector.broadcast %cst_5 : f32 to vector<128x1xf32>
    %cst_6 = arith.constant 1.000000e+00 : f32
    %28 = vector.broadcast %cst_6 : f32 to vector<1x128xf32>
    %cst_7 = arith.constant 0.000000e+00 : f32
    %29 = vector.broadcast %cst_7 : f32 to vector<128x1xf32>
    %cst_8 = arith.constant -1.638400e+04 : f32
    %30 = vector.broadcast %cst_8 : f32 to vector<1x1xf32>
    %c0_i32 = arith.constant 0 : i32
    %c9_i32 = arith.constant 9 : i32
    %31 = arith.addi %c0_i32, %c9_i32 : i32
    %c1_i32 = arith.constant 1 : i32
    %32:4 = scf.for %arg4 = %c0_i32 to %31 step %c1_i32 iter_args(%arg5 = %27, %arg6 = %28, %arg7 = %29, %arg8 = %30) -> (vector<128x1xf32>, vector<1x128xf32>, vector<128x1xf32>, vector<1x1xf32>)  : i32 {
      %69 = arith.mulf %26, %26 : vector<128x128xf32>
      %70 = vector.broadcast %arg8 : vector<1x1xf32> to vector<128x128xf32>
      %71 = arith.mulf %70, %69 : vector<128x128xf32>
      %72 = math.exp %71 : vector<128x128xf32>
      %73 = vector.broadcast %arg6 : vector<1x128xf32> to vector<128x128xf32>
      %74 = arith.mulf %72, %73 : vector<128x128xf32>
      %cst_20 = arith.constant dense<0.000000e+00> : vector<128xf32>
      %75 = vector.multi_reduction <add>, %74, %cst_20 [1] : vector<128x128xf32> to vector<128xf32>
      %76 = vector.shape_cast %75 : vector<128xf32> to vector<128x1xf32>
      %cst_21 = arith.constant 9.99999971E-10 : f32
      %77 = vector.broadcast %cst_21 : f32 to vector<128x1xf32>
      %78 = arith.maximumf %76, %77 : vector<128x1xf32>
      %79 = arith.divf %arg5, %78 : vector<128x1xf32>
      %80 = vector.broadcast %79 : vector<128x1xf32> to vector<128x128xf32>
      %81 = arith.mulf %74, %80 : vector<128x128xf32>
      %cst_22 = arith.constant dense<0.000000e+00> : vector<128xf32>
      %82 = vector.multi_reduction <add>, %81, %cst_22 [0] : vector<128x128xf32> to vector<128xf32>
      %83 = vector.shape_cast %82 : vector<128xf32> to vector<1x128xf32>
      %cst_23 = arith.constant 9.99999971E-10 : f32
      %84 = vector.broadcast %cst_23 : f32 to vector<1x128xf32>
      %85 = arith.addf %83, %84 : vector<1x128xf32>
      %cst_24 = arith.constant 9.99999971E-10 : f32
      %86 = vector.broadcast %cst_24 : f32 to vector<1x128xf32>
      %87 = arith.maximumf %85, %86 : vector<1x128xf32>
      %88 = arith.divf %arg6, %87 : vector<1x128xf32>
      %cst_25 = arith.constant 1.000000e+00 : f32
      %89 = vector.broadcast %cst_25 : f32 to vector<1x128xf32>
      %90 = arith.minimumf %88, %89 : vector<1x128xf32>
      %91 = vector.broadcast %90 : vector<1x128xf32> to vector<128x128xf32>
      %92 = arith.mulf %81, %91 : vector<128x128xf32>
      %93 = arith.mulf %90, %83 : vector<1x128xf32>
      %94 = arith.mulf %26, %92 : vector<128x128xf32>
      %cst_26 = arith.constant dense<0.000000e+00> : vector<128xf32>
      %95 = vector.multi_reduction <add>, %94, %cst_26 [1] : vector<128x128xf32> to vector<128xf32>
      %96 = vector.shape_cast %95 : vector<128xf32> to vector<128x1xf32>
      %97 = arith.addf %arg7, %96 : vector<128x1xf32>
      %98 = tpu.transpose %93, [1, 0] : vector<1x128xf32> -> vector<128x1xf32>
      %99 = arith.subf %arg5, %98 : vector<128x1xf32>
      %cst_27 = arith.constant 0.000000e+00 : f32
      %100 = vector.broadcast %cst_27 : f32 to vector<128x1xf32>
      %101 = arith.maximumf %99, %100 : vector<128x1xf32>
      %102 = arith.subf %arg6, %93 : vector<1x128xf32>
      %cst_28 = arith.constant 0.000000e+00 : f32
      %103 = vector.broadcast %cst_28 : f32 to vector<1x128xf32>
      %104 = arith.maximumf %102, %103 : vector<1x128xf32>
      %cst_29 = arith.constant 2.500000e-01 : f32
      %105 = vector.broadcast %cst_29 : f32 to vector<1x1xf32>
      %106 = arith.mulf %arg8, %105 : vector<1x1xf32>
      scf.yield %101, %104, %97, %106 : vector<128x1xf32>, vector<1x128xf32>, vector<128x1xf32>, vector<1x1xf32>
    }
    %33 = vector.shape_cast %32#1 : vector<1x128xf32> to vector<1x1x128xf32>
    %cst_9 = arith.constant dense<0.000000e+00> : vector<1xf32>
    %34 = vector.multi_reduction <add>, %33, %cst_9 [1, 2] : vector<1x1x128xf32> to vector<1xf32>
    %35 = vector.shape_cast %34 : vector<1xf32> to vector<1x1x1xf32>
    %36 = vector.extract %35[0, 0, 0] : f32 from vector<1x1x1xf32>
    %37 = vector.broadcast %36 : f32 to vector<1x1xf32>
    %cst_10 = arith.constant 9.99999971E-10 : f32
    %38 = vector.broadcast %cst_10 : f32 to vector<1x1xf32>
    %39 = arith.maximumf %37, %38 : vector<1x1xf32>
    %40 = vector.shape_cast %32#0 : vector<128x1xf32> to vector<1x128x1xf32>
    %cst_11 = arith.constant dense<0.000000e+00> : vector<1xf32>
    %41 = vector.multi_reduction <add>, %40, %cst_11 [1, 2] : vector<1x128x1xf32> to vector<1xf32>
    %42 = vector.shape_cast %41 : vector<1xf32> to vector<1x1x1xf32>
    %43 = vector.extract %42[0, 0, 0] : f32 from vector<1x1x1xf32>
    %44 = vector.broadcast %43 : f32 to vector<1x1xf32>
    %45 = arith.divf %44, %39 : vector<1x1xf32>
    %46 = vector.broadcast %45 : vector<1x1xf32> to vector<1x128xf32>
    %47 = arith.mulf %32#1, %46 : vector<1x128xf32>
    %cst_12 = arith.constant 9.99999971E-10 : f32
    %48 = vector.broadcast %cst_12 : f32 to vector<1x128xf32>
    %49 = arith.addf %47, %48 : vector<1x128xf32>
    %cst_13 = arith.constant 9.99999971E-10 : f32
    %50 = vector.broadcast %cst_13 : f32 to vector<1x128xf32>
    %51 = arith.maximumf %49, %50 : vector<1x128xf32>
    %52 = arith.divf %32#1, %51 : vector<1x128xf32>
    %cst_14 = arith.constant 1.000000e+00 : f32
    %53 = vector.broadcast %cst_14 : f32 to vector<1x128xf32>
    %54 = arith.minimumf %52, %53 : vector<1x128xf32>
    %55 = arith.mulf %32#1, %54 : vector<1x128xf32>
    %56 = vector.broadcast %55 : vector<1x128xf32> to vector<128x128xf32>
    %57 = arith.mulf %26, %56 : vector<128x128xf32>
    %cst_15 = arith.constant dense<0.000000e+00> : vector<128xf32>
    %58 = vector.multi_reduction <add>, %57, %cst_15 [1] : vector<128x128xf32> to vector<128xf32>
    %59 = vector.shape_cast %58 : vector<128xf32> to vector<128x1xf32>
    %60 = vector.broadcast %39 : vector<1x1xf32> to vector<128x1xf32>
    %61 = arith.divf %32#0, %60 : vector<128x1xf32>
    %62 = arith.mulf %61, %59 : vector<128x1xf32>
    %63 = arith.addf %32#2, %62 : vector<128x1xf32>
    %64 = vector.shape_cast %63 : vector<128x1xf32> to vector<1x128x1xf32>
    %cst_16 = arith.constant dense<0.000000e+00> : vector<1xf32>
    %65 = vector.multi_reduction <add>, %64, %cst_16 [1, 2] : vector<1x128x1xf32> to vector<1xf32>
    %66 = vector.shape_cast %65 : vector<1xf32> to vector<1x1x1xf32>
    %67 = vector.extract %66[0, 0, 0] : f32 from vector<1x1x1xf32>
    %c0_17 = arith.constant 0 : index
    %c0_18 = arith.constant 0 : index
    %c0_19 = arith.constant 0 : index
    %68 = memref.load %arg3[%c0_17, %c0_18, %c0_19] : memref<1x1x1xf32, #tpu.memory_space<smem>>
    memref.store %67, %arg3[%c0_17, %c0_18, %c0_19] : memref<1x1x1xf32, #tpu.memory_space<smem>>
    return
  }
  func.func @transform_0(%arg0: i32) -> (i32, i32, i32) {
    %c0_i32 = arith.constant 0 : i32
    %c0_i32_0 = arith.constant 0 : i32
    %c0_i32_1 = arith.constant 0 : i32
    return %arg0, %c0_i32, %c0_i32_0 : i32, i32, i32
  }
  func.func @transform_1(%arg0: i32) -> (i32, i32, i32) {
    %c0_i32 = arith.constant 0 : i32
    %c0_i32_0 = arith.constant 0 : i32
    %c0_i32_1 = arith.constant 0 : i32
    return %arg0, %c0_i32, %c0_i32_0 : i32, i32, i32
  }
  func.func @transform_2(%arg0: i32) -> (i32, i32, i32) {
    %c0_i32 = arith.constant 0 : i32
    %c0_i32_0 = arith.constant 0 : i32
    %c0_i32_1 = arith.constant 0 : i32
    return %arg0, %c0_i32, %c0_i32_0 : i32, i32, i32
  }
}

</mosaic_0001>

<llo_original>
// kernel: tpu_custom_call.1
$region0: #{tpu_custom_call.1}
  #allocation0 [shape = 'u32[]', space=smem, size = 0x4, offset = 0x4, fixed_abs, tag = 'smem constant byte address 0x4 - core index']
  #allocation1 [shape = 'u32[144,128]{1,0:T(1,128)}', space=vmem, size = 0x12000, scoped, tag = 'internal scratch']
  %s0 = inlined_call_operand.vmem [shape: f32[2,128,3], index: 0, kind: input, shape index: {}]
  %s1 = inlined_call_operand.vmem [shape: f32[2,3,128], index: 1, kind: input, shape index: {}]
  %s2 = inlined_call_operand.vmem [shape: f32[2,1,1], index: 2, kind: output, shape index: {}]
  %s3 = sld [smem:[#allocation0]]
  $region48: #{tpu_custom_call.1} parent=0
    _
  %s5 = ssub.s32 1, %s3
  %s6 = scalar_select 0, %s5, %s3
  $region1: #{tpu_custom_call.1} parent=0
    #allocation2 [shape = 'u8[1024]{0}', space=smem, size = 0x400, scoped, tag = 'output window, operand 0']
    #allocation3 [shape = 's32[2]{0}', space=sflag, size = 0x8, scoped, tag = 'scoped memory for tpu_custom_call.1']
    %7 = vsyncpa [#allocation3], 0
    %s8 = scalar_lea.sflag [#allocation3], 1
    %9 = vsyncpa %s8, 0
    loop: start=0, step=1, limit=4
    $region2: #{tpu_custom_call.1} parent=1 // loop_pre_header
      _
    $region3: #{tpu_custom_call.1} parent=1 // loop_header
      %s11 = sphi 0, %s15
      %p12 = scmp.ge.s32.totalorder %s11, 4
      %s21 = sphi 0, %s23
      %s24 = sphi 0, %s21
      %s25 = sphi 0, %s24
      %s41 = sphi 0, %s25
      %s47 = sphi 0, %s49
      %s50 = sphi 0, %s47
      %s51 = sphi 0, %s50
      %s67 = sphi 0, %s51
      %s73 = sphi 0, %s75
      %s76 = sphi 0, %s73
      %s77 = sphi 0, %s76
      %s93 = sphi 0, %s77
    $region4: #{tpu_custom_call.1} parent=1 // loop_header_branch
      %14 = sbr.rel (%p12) target = $region8
    $region5: #{tpu_custom_call.1} parent=1 // loop_body
      %s16 = ssub.s32 %s11, 1
      %s17 = ssub.s32 %s11, 2
      %s18 = sadd.s32 %s11, 1
      %s19 = ssub.s32 %s11, %s18
      %p20 = scmp.eq.s32.totalorder %s19, 0
      %s22 = sadd.s32 %s21, 1
      %s23 = scalar_select %p20, %s21, %s22
      %p26 = pneg %p20
      %p27 = scmp.eq.s32.totalorder %s11, 1
      %p28 = por %p26, %p27
      %p29 = scmp.ne.s32.totalorder %s21, %s24
      %p30 = scmp.eq.s32.totalorder %s11, 0
      %p31 = por %p29, %p30
      %p32 = scmp.ne.s32.totalorder %s21, %s24
      %p33 = scmp.eq.s32.totalorder %s16, 1
      %p34 = por %p32, %p33
      %p35 = scmp.ne.s32.totalorder %s24, %s25
      %p36 = scmp.eq.s32.totalorder %s16, 0
      %p37 = por %p35, %p36
      %p38 = scmp.ne.s32.totalorder %s24, %s25
      %p39 = scmp.eq.s32.totalorder %s17, 1
      %p40 = por %p38, %p39
      %p42 = scmp.ne.s32.totalorder %s25, %s41
      %p43 = scmp.eq.s32.totalorder %s17, 0
      %p44 = por %p42, %p43
      %s45 = ssub.s32 %s11, %s18
      %p46 = scmp.eq.s32.totalorder %s45, 0
      %s48 = sadd.s32 %s47, 1
      %s49 = scalar_select %p46, %s47, %s48
      %p52 = pneg %p46
      %p53 = scmp.eq.s32.totalorder %s11, 1
      %p54 = por %p52, %p53
      %p55 = scmp.ne.s32.totalorder %s47, %s50
      %p56 = scmp.eq.s32.totalorder %s11, 0
      %p57 = por %p55, %p56
      %p58 = scmp.ne.s32.totalorder %s47, %s50
      %p59 = scmp.eq.s32.totalorder %s16, 1
      %p60 = por %p58, %p59
      %p61 = scmp.ne.s32.totalorder %s50, %s51
      %p62 = scmp.eq.s32.totalorder %s16, 0
      %p63 = por %p61, %p62
      %p64 = scmp.ne.s32.totalorder %s50, %s51
      %p65 = scmp.eq.s32.totalorder %s17, 1
      %p66 = por %p64, %p65
      %p68 = scmp.ne.s32.totalorder %s51, %s67
      %p69 = scmp.eq.s32.totalorder %s17, 0
      %p70 = por %p68, %p69
      %s71 = ssub.s32 %s11, %s18
      %p72 = scmp.eq.s32.totalorder %s71, 0
      %s74 = sadd.s32 %s73, 1
      %s75 = scalar_select %p72, %s73, %s74
      %p78 = pneg %p72
      %p79 = scmp.eq.s32.totalorder %s11, 1
      %p80 = por %p78, %p79
      %p81 = scmp.ne.s32.totalorder %s73, %s76
      %p82 = scmp.eq.s32.totalorder %s11, 0
      %p83 = por %p81, %p82
      %p84 = scmp.ne.s32.totalorder %s73, %s76
      %p85 = scmp.eq.s32.totalorder %s16, 1
      %p86 = por %p84, %p85
      %p87 = scmp.ne.s32.totalorder %s76, %s77
      %p88 = scmp.eq.s32.totalorder %s16, 0
      %p89 = por %p87, %p88
      %p90 = scmp.ne.s32.totalorder %s76, %s77
      %p91 = scmp.eq.s32.totalorder %s17, 1
      %p92 = por %p90, %p91
      %p94 = scmp.ne.s32.totalorder %s77, %s93
      %p95 = scmp.eq.s32.totalorder %s17, 0
      %p96 = por %p94, %p95
      %p97 = scmp.le.s32.totalorder 1, %s11
      %p98 = scmp.lt.s32.totalorder %s11, 3
      %p99 = pnand %p97, %p98
      %p100 = pneg %p99
      // Predicated region
      $region9: #{tpu_custom_call.1} parent=5 // pred_check
        _
      $region10: #{tpu_custom_call.1} parent=5 // pred_check_branch
        %102 = sbr.rel (%p99) target = $region12
      $region11: #{tpu_custom_call.1} parent=5 // pred_region
        %s103 = ssub.s32 %s11, 1
      $region12: #{tpu_custom_call.1} parent=5 // pred_fallthru
        _
      %p104 = scmp.lt.s32.totalorder %s11, 2
      // Predicated region
      $region13: #{tpu_custom_call.1} parent=5 // pred_check
        %p105 = pneg %p104
      $region14: #{tpu_custom_call.1} parent=5 // pred_check_branch
        %107 = sbr.rel (%p105) target = $region16
      $region15: #{tpu_custom_call.1} parent=5 // pred_region
        // Predicated region
        $region17: #{tpu_custom_call.1} parent=15 // pred_check
          %p108 = pneg %p31
        $region18: #{tpu_custom_call.1} parent=15 // pred_check_branch
          %110 = sbr.rel (%p108) target = $region20
        $region19: #{tpu_custom_call.1} parent=15 // pred_region
          %p111 = scmp.lt.s32.totalorder %s11, 1
          %s112 = scalar_select %p111, %s11, 1
          %s113 = smul.addr %s112, 16
          %s114 = smul.addr %s113, 8
          %s115 = scalar_lea.vmem %s0, %s114
        $region20: #{tpu_custom_call.1} parent=15 // pred_fallthru
          _
        // Predicated region
        $region21: #{tpu_custom_call.1} parent=15 // pred_check
          %p116 = pneg %p57
        $region22: #{tpu_custom_call.1} parent=15 // pred_check_branch
          %118 = sbr.rel (%p116) target = $region24
        $region23: #{tpu_custom_call.1} parent=15 // pred_region
          %p119 = scmp.lt.s32.totalorder %s11, 1
          %s120 = scalar_select %p119, %s11, 1
          %s121 = smul.addr %s120, 4
          %s122 = scalar_lea.vmem %s1, %s121
        $region24: #{tpu_custom_call.1} parent=15 // pred_fallthru
          _
      $region16: #{tpu_custom_call.1} parent=5 // pred_fallthru
        _
      %p123 = scmp.le.s32.totalorder 1, %s11
      %p124 = scmp.lt.s32.totalorder %s11, 3
      %p125 = pnand %p123, %p124
      %p126 = pneg %p125
      // Predicated region
      $region25: #{tpu_custom_call.1} parent=5 // pred_check
        _
      $region26: #{tpu_custom_call.1} parent=5 // pred_check_branch
        %128 = sbr.rel (%p125) target = $region28
      $region27: #{tpu_custom_call.1} parent=5 // pred_region
        %s129 = ssub.s32 %s11, 1
        %p130 = scmp.lt.s32.totalorder %s16, 1
        %s131 = scalar_select %p130, %s16, 1
        %s132 = smul.addr %s131, 16
        %s133 = smul.addr %s132, 8
        %s134 = scalar_lea.vmem %s0, %s133
        %p135 = pneg %p37
        %p136 = pneg %p34
        %p137 = scmp.lt.s32.totalorder %s16, 1
        %s138 = scalar_select %p137, %s16, 1
        %s139 = smul.addr %s138, 4
        %s140 = scalar_lea.vmem %s1, %s139
        %p141 = pneg %p63
        %p142 = pneg %p60
        %p143 = pneg %p89
        %p144 = pneg %p86
        %s145 = sand.u32 %s76, 1
        %s146 = scalar_lea.sflag [#allocation3], %s145
        %s147 = sand.u32 %s76, 1
        %s148 = smul.addr %s147, 128
        %s149 = scalar_lea.smem [#allocation2], %s148
        %p150 = scmp.lt.s32.totalorder %s16, 1
        %s151 = scalar_select %p150, %s16, 1
        %s152 = smul.addr %s151, 16
        %s153 = smul.addr %s152, 8
        %s154 = scalar_lea.vmem %s0, %s153
        %p155 = scmp.lt.s32.totalorder %s16, 1
        %s156 = scalar_select %p155, %s16, 1
        %s157 = smul.addr %s156, 4
        %s158 = scalar_lea.vmem %s1, %s157
        %v159 = vld [vmem:[%s154] sm:$0xff]
        %v160 = vld [vmem:[%s154 + $0x8] sm:$0xff]
        %v161 = vld [vmem:[%s154 + $0x10] sm:$0xff]
        %v162 = vld [vmem:[%s154 + $0x18] sm:$0xff]
        %v163 = vld [vmem:[%s154 + $0x20] sm:$0xff]
        %v164 = vld [vmem:[%s154 + $0x28] sm:$0xff]
        %v165 = vld [vmem:[%s154 + $0x30] sm:$0xff]
        %v166 = vld [vmem:[%s154 + $0x38] sm:$0xff]
        %v167 = vld [vmem:[%s154 + $0x40] sm:$0xff]
        %v168 = vld [vmem:[%s154 + $0x48] sm:$0xff]
        %v169 = vld [vmem:[%s154 + $0x50] sm:$0xff]
        %v170 = vld [vmem:[%s154 + $0x58] sm:$0xff]
        %v171 = vld [vmem:[%s154 + $0x60] sm:$0xff]
        %v172 = vld [vmem:[%s154 + $0x68] sm:$0xff]
        %v173 = vld [vmem:[%s154 + $0x70] sm:$0xff]
        %v174 = vld [vmem:[%s154 + $0x78] sm:$0xff]
        %v175 = vld [vmem:[%s158] sm:$0x7]
        %177 = vset.pattern.permute.xlu0 0
        %178 = vperm.xlu0 %177, %v159
        %v179 = vpop.permute.xlu0 %178
        %182 = vset.pattern.permute.xlu0 0
        %183 = vperm.xlu0 %182, %v160
        %v184 = vpop.permute.xlu0 %183
        %187 = vset.pattern.permute.xlu0 0
        %188 = vperm.xlu0 %187, %v161
        %v189 = vpop.permute.xlu0 %188
        %192 = vset.pattern.permute.xlu0 0
        %193 = vperm.xlu0 %192, %v162
        %v194 = vpop.permute.xlu0 %193
        %197 = vset.pattern.permute.xlu0 0
        %198 = vperm.xlu0 %197, %v163
        %v199 = vpop.permute.xlu0 %198
        %202 = vset.pattern.permute.xlu0 0
        %203 = vperm.xlu0 %202, %v164
        %v204 = vpop.permute.xlu0 %203
        %207 = vset.pattern.permute.xlu0 0
        %208 = vperm.xlu0 %207, %v165
        %v209 = vpop.permute.xlu0 %208
        %212 = vset.pattern.permute.xlu0 0
        %213 = vperm.xlu0 %212, %v166
        %v214 = vpop.permute.xlu0 %213
        %217 = vset.pattern.permute.xlu0 0
        %218 = vperm.xlu0 %217, %v167
        %v219 = vpop.permute.xlu0 %218
        %222 = vset.pattern.permute.xlu0 0
        %223 = vperm.xlu0 %222, %v168
        %v224 = vpop.permute.xlu0 %223
        %227 = vset.pattern.permute.xlu0 0
        %228 = vperm.xlu0 %227, %v169
        %v229 = vpop.permute.xlu0 %228
        %232 = vset.pattern.permute.xlu0 0
        %233 = vperm.xlu0 %232, %v170
        %v234 = vpop.permute.xlu0 %233
        %237 = vset.pattern.permute.xlu0 0
        %238 = vperm.xlu0 %237, %v171
        %v239 = vpop.permute.xlu0 %238
        %242 = vset.pattern.permute.xlu0 0
        %243 = vperm.xlu0 %242, %v172
        %v244 = vpop.permute.xlu0 %243
        %247 = vset.pattern.permute.xlu0 0
        %248 = vperm.xlu0 %247, %v173
        %v249 = vpop.permute.xlu0 %248
        %252 = vset.pattern.permute.xlu0 0
        %253 = vperm.xlu0 %252, %v174
        %v254 = vpop.permute.xlu0 %253
        %v256 = vlaneseq
        %v257 = vshrl.u32 %v256, 7
        %v258 = vsub.s32 0, %v257
        %v259 = vrot.slane %v175, %v258
        %v260 = vsub.f32 %v179, %v259
        %v261 = vsub.f32 %v184, %v259
        %v262 = vsub.f32 %v189, %v259
        %v263 = vsub.f32 %v194, %v259
        %v264 = vsub.f32 %v199, %v259
        %v265 = vsub.f32 %v204, %v259
        %v266 = vsub.f32 %v209, %v259
        %v267 = vsub.f32 %v214, %v259
        %v268 = vsub.f32 %v219, %v259
        %v269 = vsub.f32 %v224, %v259
        %v270 = vsub.f32 %v229, %v259
        %v271 = vsub.f32 %v234, %v259
        %v272 = vsub.f32 %v239, %v259
        %v273 = vsub.f32 %v244, %v259
        %v274 = vsub.f32 %v249, %v259
        %v275 = vsub.f32 %v254, %v259
        %v276 = vmul.f32 %v260, %v260
        %v277 = vmul.f32 %v261, %v261
        %v278 = vmul.f32 %v262, %v262
        %v279 = vmul.f32 %v263, %v263
        %v280 = vmul.f32 %v264, %v264
        %v281 = vmul.f32 %v265, %v265
        %v282 = vmul.f32 %v266, %v266
        %v283 = vmul.f32 %v267, %v267
        %v284 = vmul.f32 %v268, %v268
        %v285 = vmul.f32 %v269, %v269
        %v286 = vmul.f32 %v270, %v270
        %v287 = vmul.f32 %v271, %v271
        %v288 = vmul.f32 %v272, %v272
        %v289 = vmul.f32 %v273, %v273
        %v290 = vmul.f32 %v274, %v274
        %v291 = vmul.f32 %v275, %v275
        %v292 = vadd.f32 %v276, 0.0
        %v293 = vadd.f32 %v277, 0.0
        %v294 = vadd.f32 %v278, 0.0
        %v295 = vadd.f32 %v279, 0.0
        %v296 = vadd.f32 %v280, 0.0
        %v297 = vadd.f32 %v281, 0.0
        %v298 = vadd.f32 %v282, 0.0
        %v299 = vadd.f32 %v283, 0.0
        %v300 = vadd.f32 %v284, 0.0
        %v301 = vadd.f32 %v285, 0.0
        %v302 = vadd.f32 %v286, 0.0
        %v303 = vadd.f32 %v287, 0.0
        %v304 = vadd.f32 %v288, 0.0
        %v305 = vadd.f32 %v289, 0.0
        %v306 = vadd.f32 %v290, 0.0
        %v307 = vadd.f32 %v291, 0.0
        %308 = vset.pattern.permute.xlu0 1
        %309 = vperm.xlu0 %308, %v159
        %v310 = vpop.permute.xlu0 %309
        %312 = vset.pattern.permute.xlu0 1
        %313 = vperm.xlu0 %312, %v160
        %v314 = vpop.permute.xlu0 %313
        %316 = vset.pattern.permute.xlu0 1
        %317 = vperm.xlu0 %316, %v161
        %v318 = vpop.permute.xlu0 %317
        %320 = vset.pattern.permute.xlu0 1
        %321 = vperm.xlu0 %320, %v162
        %v322 = vpop.permute.xlu0 %321
        %324 = vset.pattern.permute.xlu0 1
        %325 = vperm.xlu0 %324, %v163
        %v326 = vpop.permute.xlu0 %325
        %328 = vset.pattern.permute.xlu0 1
        %329 = vperm.xlu0 %328, %v164
        %v330 = vpop.permute.xlu0 %329
        %332 = vset.pattern.permute.xlu0 1
        %333 = vperm.xlu0 %332, %v165
        %v334 = vpop.permute.xlu0 %333
        %336 = vset.pattern.permute.xlu0 1
        %337 = vperm.xlu0 %336, %v166
        %v338 = vpop.permute.xlu0 %337
        %340 = vset.pattern.permute.xlu0 1
        %341 = vperm.xlu0 %340, %v167
        %v342 = vpop.permute.xlu0 %341
        %344 = vset.pattern.permute.xlu0 1
        %345 = vperm.xlu0 %344, %v168
        %v346 = vpop.permute.xlu0 %345
        %348 = vset.pattern.permute.xlu0 1
        %349 = vperm.xlu0 %348, %v169
        %v350 = vpop.permute.xlu0 %349
        %352 = vset.pattern.permute.xlu0 1
        %353 = vperm.xlu0 %352, %v170
        %v354 = vpop.permute.xlu0 %353
        %356 = vset.pattern.permute.xlu0 1
        %357 = vperm.xlu0 %356, %v171
        %v358 = vpop.permute.xlu0 %357
        %360 = vset.pattern.permute.xlu0 1
        %361 = vperm.xlu0 %360, %v172
        %v362 = vpop.permute.xlu0 %361
        %364 = vset.pattern.permute.xlu0 1
        %365 = vperm.xlu0 %364, %v173
        %v366 = vpop.permute.xlu0 %365
        %368 = vset.pattern.permute.xlu0 1
        %369 = vperm.xlu0 %368, %v174
        %v370 = vpop.permute.xlu0 %369
        %v372 = vlaneseq
        %v373 = vshrl.u32 %v372, 7
        %v374 = vsub.s32 1, %v373
        %v375 = vrot.slane %v175, %v374
        %v376 = vsub.f32 %v310, %v375
        %v377 = vsub.f32 %v314, %v375
        %v378 = vsub.f32 %v318, %v375
        %v379 = vsub.f32 %v322, %v375
        %v380 = vsub.f32 %v326, %v375
        %v381 = vsub.f32 %v330, %v375
        %v382 = vsub.f32 %v334, %v375
        %v383 = vsub.f32 %v338, %v375
        %v384 = vsub.f32 %v342, %v375
        %v385 = vsub.f32 %v346, %v375
        %v386 = vsub.f32 %v350, %v375
        %v387 = vsub.f32 %v354, %v375
        %v388 = vsub.f32 %v358, %v375
        %v389 = vsub.f32 %v362, %v375
        %v390 = vsub.f32 %v366, %v375
        %v391 = vsub.f32 %v370, %v375
        %v392 = vmul.f32 %v376, %v376
        %v393 = vmul.f32 %v377, %v377
        %v394 = vmul.f32 %v378, %v378
        %v395 = vmul.f32 %v379, %v379
        %v396 = vmul.f32 %v380, %v380
        %v397 = vmul.f32 %v381, %v381
        %v398 = vmul.f32 %v382, %v382
        %v399 = vmul.f32 %v383, %v383
        %v400 = vmul.f32 %v384, %v384
        %v401 = vmul.f32 %v385, %v385
        %v402 = vmul.f32 %v386, %v386
        %v403 = vmul.f32 %v387, %v387
        %v404 = vmul.f32 %v388, %v388
        %v405 = vmul.f32 %v389, %v389
        %v406 = vmul.f32 %v390, %v390
        %v407 = vmul.f32 %v391, %v391
        %v408 = vadd.f32 %v292, %v392
        %v409 = vadd.f32 %v293, %v393
        %v410 = vadd.f32 %v294, %v394
        %v411 = vadd.f32 %v295, %v395
        %v412 = vadd.f32 %v296, %v396
        %v413 = vadd.f32 %v297, %v397
        %v414 = vadd.f32 %v298, %v398
        %v415 = vadd.f32 %v299, %v399
        %v416 = vadd.f32 %v300, %v400
        %v417 = vadd.f32 %v301, %v401
        %v418 = vadd.f32 %v302, %v402
        %v419 = vadd.f32 %v303, %v403
        %v420 = vadd.f32 %v304, %v404
        %v421 = vadd.f32 %v305, %v405
        %v422 = vadd.f32 %v306, %v406
        %v423 = vadd.f32 %v307, %v407
        %424 = vset.pattern.permute.xlu0 2
        %425 = vperm.xlu0 %424, %v159
        %v426 = vpop.permute.xlu0 %425
        %428 = vset.pattern.permute.xlu0 2
        %429 = vperm.xlu0 %428, %v160
        %v430 = vpop.permute.xlu0 %429
        %432 = vset.pattern.permute.xlu0 2
        %433 = vperm.xlu0 %432, %v161
        %v434 = vpop.permute.xlu0 %433
        %436 = vset.pattern.permute.xlu0 2
        %437 = vperm.xlu0 %436, %v162
        %v438 = vpop.permute.xlu0 %437
        %440 = vset.pattern.permute.xlu0 2
        %441 = vperm.xlu0 %440, %v163
        %v442 = vpop.permute.xlu0 %441
        %444 = vset.pattern.permute.xlu0 2
        %445 = vperm.xlu0 %444, %v164
        %v446 = vpop.permute.xlu0 %445
        %448 = vset.pattern.permute.xlu0 2
        %449 = vperm.xlu0 %448, %v165
        %v450 = vpop.permute.xlu0 %449
        %452 = vset.pattern.permute.xlu0 2
        %453 = vperm.xlu0 %452, %v166
        %v454 = vpop.permute.xlu0 %453
        %456 = vset.pattern.permute.xlu0 2
        %457 = vperm.xlu0 %456, %v167
        %v458 = vpop.permute.xlu0 %457
        %460 = vset.pattern.permute.xlu0 2
        %461 = vperm.xlu0 %460, %v168
        %v462 = vpop.permute.xlu0 %461
        %464 = vset.pattern.permute.xlu0 2
        %465 = vperm.xlu0 %464, %v169
        %v466 = vpop.permute.xlu0 %465
        %468 = vset.pattern.permute.xlu0 2
        %469 = vperm.xlu0 %468, %v170
        %v470 = vpop.permute.xlu0 %469
        %472 = vset.pattern.permute.xlu0 2
        %473 = vperm.xlu0 %472, %v171
        %v474 = vpop.permute.xlu0 %473
        %476 = vset.pattern.permute.xlu0 2
        %477 = vperm.xlu0 %476, %v172
        %v478 = vpop.permute.xlu0 %477
        %480 = vset.pattern.permute.xlu0 2
        %481 = vperm.xlu0 %480, %v173
        %v482 = vpop.permute.xlu0 %481
        %484 = vset.pattern.permute.xlu0 2
        %485 = vperm.xlu0 %484, %v174
        %v486 = vpop.permute.xlu0 %485
        %v488 = vlaneseq
        %v489 = vshrl.u32 %v488, 7
        %v490 = vsub.s32 2, %v489
        %v491 = vrot.slane %v175, %v490
        %v492 = vsub.f32 %v426, %v491
        %v493 = vsub.f32 %v430, %v491
        %v494 = vsub.f32 %v434, %v491
        %v495 = vsub.f32 %v438, %v491
        %v496 = vsub.f32 %v442, %v491
        %v497 = vsub.f32 %v446, %v491
        %v498 = vsub.f32 %v450, %v491
        %v499 = vsub.f32 %v454, %v491
        %v500 = vsub.f32 %v458, %v491
        %v501 = vsub.f32 %v462, %v491
        %v502 = vsub.f32 %v466, %v491
        %v503 = vsub.f32 %v470, %v491
        %v504 = vsub.f32 %v474, %v491
        %v505 = vsub.f32 %v478, %v491
        %v506 = vsub.f32 %v482, %v491
        %v507 = vsub.f32 %v486, %v491
        %v508 = vmul.f32 %v492, %v492
        %v509 = vmul.f32 %v493, %v493
        %v510 = vmul.f32 %v494, %v494
        %v511 = vmul.f32 %v495, %v495
        %v512 = vmul.f32 %v496, %v496
        %v513 = vmul.f32 %v497, %v497
        %v514 = vmul.f32 %v498, %v498
        %v515 = vmul.f32 %v499, %v499
        %v516 = vmul.f32 %v500, %v500
        %v517 = vmul.f32 %v501, %v501
        %v518 = vmul.f32 %v502, %v502
        %v519 = vmul.f32 %v503, %v503
        %v520 = vmul.f32 %v504, %v504
        %v521 = vmul.f32 %v505, %v505
        %v522 = vmul.f32 %v506, %v506
        %v523 = vmul.f32 %v507, %v507
        %v524 = vadd.f32 %v408, %v508
        %v525 = vadd.f32 %v409, %v509
        %v526 = vadd.f32 %v410, %v510
        %v527 = vadd.f32 %v411, %v511
        %v528 = vadd.f32 %v412, %v512
        %v529 = vadd.f32 %v413, %v513
        %v530 = vadd.f32 %v414, %v514
        %v531 = vadd.f32 %v415, %v515
        %v532 = vadd.f32 %v416, %v516
        %v533 = vadd.f32 %v417, %v517
        %v534 = vadd.f32 %v418, %v518
        %v535 = vadd.f32 %v419, %v519
        %v536 = vadd.f32 %v420, %v520
        %v537 = vadd.f32 %v421, %v521
        %v538 = vadd.f32 %v422, %v522
        %v539 = vadd.f32 %v423, %v523
        %v540 = vrsqrt.pop %v524
        %v541 = vmul.f32 %v524, %v540
        %vm542 = vcmp.eq.f32.partialorder %v524, inf
        %v543 = vsel %vm542, %v524, %v541
        %vm544 = vcmp.eq.f32.partialorder %v524, 0.0
        %v545 = vand.u32 %v524, 2147483648
        %v546 = vsel %vm544, %v545, %v543
        %v547 = vrsqrt.pop %v525
        %v548 = vmul.f32 %v525, %v547
        %vm549 = vcmp.eq.f32.partialorder %v525, inf
        %v550 = vsel %vm549, %v525, %v548
        %vm551 = vcmp.eq.f32.partialorder %v525, 0.0
        %v552 = vand.u32 %v525, 2147483648
        %v553 = vsel %vm551, %v552, %v550
        %v554 = vrsqrt.pop %v526
        %v555 = vmul.f32 %v526, %v554
        %vm556 = vcmp.eq.f32.partialorder %v526, inf
        %v557 = vsel %vm556, %v526, %v555
        %vm558 = vcmp.eq.f32.partialorder %v526, 0.0
        %v559 = vand.u32 %v526, 2147483648
        %v560 = vsel %vm558, %v559, %v557
        %v561 = vrsqrt.pop %v527
        %v562 = vmul.f32 %v527, %v561
        %vm563 = vcmp.eq.f32.partialorder %v527, inf
        %v564 = vsel %vm563, %v527, %v562
        %vm565 = vcmp.eq.f32.partialorder %v527, 0.0
        %v566 = vand.u32 %v527, 2147483648
        %v567 = vsel %vm565, %v566, %v564
        %v568 = vrsqrt.pop %v528
        %v569 = vmul.f32 %v528, %v568
        %vm570 = vcmp.eq.f32.partialorder %v528, inf
        %v571 = vsel %vm570, %v528, %v569
        %vm572 = vcmp.eq.f32.partialorder %v528, 0.0
        %v573 = vand.u32 %v528, 2147483648
        %v574 = vsel %vm572, %v573, %v571
        %v575 = vrsqrt.pop %v529
        %v576 = vmul.f32 %v529, %v575
        %vm577 = vcmp.eq.f32.partialorder %v529, inf
        %v578 = vsel %vm577, %v529, %v576
        %vm579 = vcmp.eq.f32.partialorder %v529, 0.0
        %v580 = vand.u32 %v529, 2147483648
        %v581 = vsel %vm579, %v580, %v578
        %v582 = vrsqrt.pop %v530
        %v583 = vmul.f32 %v530, %v582
        %vm584 = vcmp.eq.f32.partialorder %v530, inf
        %v585 = vsel %vm584, %v530, %v583
        %vm586 = vcmp.eq.f32.partialorder %v530, 0.0
        %v587 = vand.u32 %v530, 2147483648
        %v588 = vsel %vm586, %v587, %v585
        %v589 = vrsqrt.pop %v531
        %v590 = vmul.f32 %v531, %v589
        %vm591 = vcmp.eq.f32.partialorder %v531, inf
        %v592 = vsel %vm591, %v531, %v590
        %vm593 = vcmp.eq.f32.partialorder %v531, 0.0
        %v594 = vand.u32 %v531, 2147483648
        %v595 = vsel %vm593, %v594, %v592
        %v596 = vrsqrt.pop %v532
        %v597 = vmul.f32 %v532, %v596
        %vm598 = vcmp.eq.f32.partialorder %v532, inf
        %v599 = vsel %vm598, %v532, %v597
        %vm600 = vcmp.eq.f32.partialorder %v532, 0.0
        %v601 = vand.u32 %v532, 2147483648
        %v602 = vsel %vm600, %v601, %v599
        %v603 = vrsqrt.pop %v533
        %v604 = vmul.f32 %v533, %v603
        %vm605 = vcmp.eq.f32.partialorder %v533, inf
        %v606 = vsel %vm605, %v533, %v604
        %vm607 = vcmp.eq.f32.partialorder %v533, 0.0
        %v608 = vand.u32 %v533, 2147483648
        %v609 = vsel %vm607, %v608, %v606
        %v610 = vrsqrt.pop %v534
        %v611 = vmul.f32 %v534, %v610
        %vm612 = vcmp.eq.f32.partialorder %v534, inf
        %v613 = vsel %vm612, %v534, %v611
        %vm614 = vcmp.eq.f32.partialorder %v534, 0.0
        %v615 = vand.u32 %v534, 2147483648
        %v616 = vsel %vm614, %v615, %v613
        %v617 = vrsqrt.pop %v535
        %v618 = vmul.f32 %v535, %v617
        %vm619 = vcmp.eq.f32.partialorder %v535, inf
        %v620 = vsel %vm619, %v535, %v618
        %vm621 = vcmp.eq.f32.partialorder %v535, 0.0
        %v622 = vand.u32 %v535, 2147483648
        %v623 = vsel %vm621, %v622, %v620
        %v624 = vrsqrt.pop %v536
        %v625 = vmul.f32 %v536, %v624
        %vm626 = vcmp.eq.f32.partialorder %v536, inf
        %v627 = vsel %vm626, %v536, %v625
        %vm628 = vcmp.eq.f32.partialorder %v536, 0.0
        %v629 = vand.u32 %v536, 2147483648
        %v630 = vsel %vm628, %v629, %v627
        %v631 = vrsqrt.pop %v537
        %v632 = vmul.f32 %v537, %v631
        %vm633 = vcmp.eq.f32.partialorder %v537, inf
        %v634 = vsel %vm633, %v537, %v632
        %vm635 = vcmp.eq.f32.partialorder %v537, 0.0
        %v636 = vand.u32 %v537, 2147483648
        %v637 = vsel %vm635, %v636, %v634
        %v638 = vrsqrt.pop %v538
        %v639 = vmul.f32 %v538, %v638
        %vm640 = vcmp.eq.f32.partialorder %v538, inf
        %v641 = vsel %vm640, %v538, %v639
        %vm642 = vcmp.eq.f32.partialorder %v538, 0.0
        %v643 = vand.u32 %v538, 2147483648
        %v644 = vsel %vm642, %v643, %v641
        %v645 = vrsqrt.pop %v539
        %v646 = vmul.f32 %v539, %v645
        %vm647 = vcmp.eq.f32.partialorder %v539, inf
        %v648 = vsel %vm647, %v539, %v646
        %vm649 = vcmp.eq.f32.partialorder %v539, 0.0
        %v650 = vand.u32 %v539, 2147483648
        %v651 = vsel %vm649, %v650, %v648
        loop: start=0, step=1, limit=9
        $region29: #{tpu_custom_call.1} parent=27 // loop_pre_header
          _
        $region30: #{tpu_custom_call.1} parent=27 // loop_header
          %s653 = sphi 0, %s657
          %p654 = scmp.ge.s32.totalorder %s653, 9
          %v658 = vphi 1.0, %v1103
          %v659 = vphi 1.0, %v1104
          %v660 = vphi 1.0, %v1105
          %v661 = vphi 1.0, %v1106
          %v662 = vphi 1.0, %v1107
          %v663 = vphi 1.0, %v1108
          %v664 = vphi 1.0, %v1109
          %v665 = vphi 1.0, %v1110
          %v666 = vphi 1.0, %v1111
          %v667 = vphi 1.0, %v1112
          %v668 = vphi 1.0, %v1113
          %v669 = vphi 1.0, %v1114
          %v670 = vphi 1.0, %v1115
          %v671 = vphi 1.0, %v1116
          %v672 = vphi 1.0, %v1117
          %v673 = vphi 1.0, %v1118
          %v674 = vphi 1.0, %v1120
          %v675 = vphi 0.0, %v1039
          %v676 = vphi 0.0, %v1040
          %v677 = vphi 0.0, %v1041
          %v678 = vphi 0.0, %v1042
          %v679 = vphi 0.0, %v1043
          %v680 = vphi 0.0, %v1044
          %v681 = vphi 0.0, %v1045
          %v682 = vphi 0.0, %v1046
          %v683 = vphi 0.0, %v1047
          %v684 = vphi 0.0, %v1048
          %v685 = vphi 0.0, %v1049
          %v686 = vphi 0.0, %v1050
          %v687 = vphi 0.0, %v1051
          %v688 = vphi 0.0, %v1052
          %v689 = vphi 0.0, %v1053
          %v690 = vphi 0.0, %v1054
          %v691 = vphi -16384.0, %v1121
        $region31: #{tpu_custom_call.1} parent=27 // loop_header_branch
          %656 = sbr.rel (%p654) target = $region35
        $region32: #{tpu_custom_call.1} parent=27 // loop_body
          %v692 = vmul.f32 %v546, %v546
          %v693 = vmul.f32 %v553, %v553
          %v694 = vmul.f32 %v560, %v560
          %v695 = vmul.f32 %v567, %v567
          %v696 = vmul.f32 %v574, %v574
          %v697 = vmul.f32 %v581, %v581
          %v698 = vmul.f32 %v588, %v588
          %v699 = vmul.f32 %v595, %v595
          %v700 = vmul.f32 %v602, %v602
          %v701 = vmul.f32 %v609, %v609
          %v702 = vmul.f32 %v616, %v616
          %v703 = vmul.f32 %v623, %v623
          %v704 = vmul.f32 %v630, %v630
          %v705 = vmul.f32 %v637, %v637
          %v706 = vmul.f32 %v644, %v644
          %v707 = vmul.f32 %v651, %v651
          %v708 = vmul.f32 %v691, %v692
          %v709 = vmul.f32 %v691, %v693
          %v710 = vmul.f32 %v691, %v694
          %v711 = vmul.f32 %v691, %v695
          %v712 = vmul.f32 %v691, %v696
          %v713 = vmul.f32 %v691, %v697
          %v714 = vmul.f32 %v691, %v698
          %v715 = vmul.f32 %v691, %v699
          %v716 = vmul.f32 %v691, %v700
          %v717 = vmul.f32 %v691, %v701
          %v718 = vmul.f32 %v691, %v702
          %v719 = vmul.f32 %v691, %v703
          %v720 = vmul.f32 %v691, %v704
          %v721 = vmul.f32 %v691, %v705
          %v722 = vmul.f32 %v691, %v706
          %v723 = vmul.f32 %v691, %v707
          %v724 = vmul.f32 %v708, 1.442695
          %v725 = vpow.pop %v724
          %v726 = vmul.f32 %v709, 1.442695
          %v727 = vpow.pop %v726
          %v728 = vmul.f32 %v710, 1.442695
          %v729 = vpow.pop %v728
          %v730 = vmul.f32 %v711, 1.442695
          %v731 = vpow.pop %v730
          %v732 = vmul.f32 %v712, 1.442695
          %v733 = vpow.pop %v732
          %v734 = vmul.f32 %v713, 1.442695
          %v735 = vpow.pop %v734
          %v736 = vmul.f32 %v714, 1.442695
          %v737 = vpow.pop %v736
          %v738 = vmul.f32 %v715, 1.442695
          %v739 = vpow.pop %v738
          %v740 = vmul.f32 %v716, 1.442695
          %v741 = vpow.pop %v740
          %v742 = vmul.f32 %v717, 1.442695
          %v743 = vpow.pop %v742
          %v744 = vmul.f32 %v718, 1.442695
          %v745 = vpow.pop %v744
          %v746 = vmul.f32 %v719, 1.442695
          %v747 = vpow.pop %v746
          %v748 = vmul.f32 %v720, 1.442695
          %v749 = vpow.pop %v748
          %v750 = vmul.f32 %v721, 1.442695
          %v751 = vpow.pop %v750
          %v752 = vmul.f32 %v722, 1.442695
          %v753 = vpow.pop %v752
          %v754 = vmul.f32 %v723, 1.442695
          %v755 = vpow.pop %v754
          %v756 = vmul.f32 %v725, %v674
          %v757 = vmul.f32 %v727, %v674
          %v758 = vmul.f32 %v729, %v674
          %v759 = vmul.f32 %v731, %v674
          %v760 = vmul.f32 %v733, %v674
          %v761 = vmul.f32 %v735, %v674
          %v762 = vmul.f32 %v737, %v674
          %v763 = vmul.f32 %v739, %v674
          %v764 = vmul.f32 %v741, %v674
          %v765 = vmul.f32 %v743, %v674
          %v766 = vmul.f32 %v745, %v674
          %v767 = vmul.f32 %v747, %v674
          %v768 = vmul.f32 %v749, %v674
          %v769 = vmul.f32 %v751, %v674
          %v770 = vmul.f32 %v753, %v674
          %v771 = vmul.f32 %v755, %v674
          %772 = vadd.xlane.f32.xlu0 %v756
          %v773 = vpop.xlane.xlu0 %772
          %774 = vadd.xlane.f32.xlu0 %v757
          %v775 = vpop.xlane.xlu0 %774
          %776 = vadd.xlane.f32.xlu0 %v758
          %v777 = vpop.xlane.xlu0 %776
          %778 = vadd.xlane.f32.xlu0 %v759
          %v779 = vpop.xlane.xlu0 %778
          %780 = vadd.xlane.f32.xlu0 %v760
          %v781 = vpop.xlane.xlu0 %780
          %782 = vadd.xlane.f32.xlu0 %v761
          %v783 = vpop.xlane.xlu0 %782
          %784 = vadd.xlane.f32.xlu0 %v762
          %v785 = vpop.xlane.xlu0 %784
          %786 = vadd.xlane.f32.xlu0 %v763
          %v787 = vpop.xlane.xlu0 %786
          %788 = vadd.xlane.f32.xlu0 %v764
          %v789 = vpop.xlane.xlu0 %788
          %790 = vadd.xlane.f32.xlu0 %v765
          %v791 = vpop.xlane.xlu0 %790
          %792 = vadd.xlane.f32.xlu0 %v766
          %v793 = vpop.xlane.xlu0 %792
          %794 = vadd.xlane.f32.xlu0 %v767
          %v795 = vpop.xlane.xlu0 %794
          %796 = vadd.xlane.f32.xlu0 %v768
          %v797 = vpop.xlane.xlu0 %796
          %798 = vadd.xlane.f32.xlu0 %v769
          %v799 = vpop.xlane.xlu0 %798
          %800 = vadd.xlane.f32.xlu0 %v770
          %v801 = vpop.xlane.xlu0 %800
          %802 = vadd.xlane.f32.xlu0 %v771
          %v803 = vpop.xlane.xlu0 %802
          %v804 = vmax.f32 %v773, 1e-09
          %v805 = vmax.f32 %v775, 1e-09
          %v806 = vmax.f32 %v777, 1e-09
          %v807 = vmax.f32 %v779, 1e-09
          %v808 = vmax.f32 %v781, 1e-09
          %v809 = vmax.f32 %v783, 1e-09
          %v810 = vmax.f32 %v785, 1e-09
          %v811 = vmax.f32 %v787, 1e-09
          %v812 = vmax.f32 %v789, 1e-09
          %v813 = vmax.f32 %v791, 1e-09
          %v814 = vmax.f32 %v793, 1e-09
          %v815 = vmax.f32 %v795, 1e-09
          %v816 = vmax.f32 %v797, 1e-09
          %v817 = vmax.f32 %v799, 1e-09
          %v818 = vmax.f32 %v801, 1e-09
          %v819 = vmax.f32 %v803, 1e-09
          %v820 = vrcp.pop %v804
          %v821 = vmul.f32 %v658, %v820
          %v822 = vrcp.pop %v805
          %v823 = vmul.f32 %v659, %v822
          %v824 = vrcp.pop %v806
          %v825 = vmul.f32 %v660, %v824
          %v826 = vrcp.pop %v807
          %v827 = vmul.f32 %v661, %v826
          %v828 = vrcp.pop %v808
          %v829 = vmul.f32 %v662, %v828
          %v830 = vrcp.pop %v809
          %v831 = vmul.f32 %v663, %v830
          %v832 = vrcp.pop %v810
          %v833 = vmul.f32 %v664, %v832
          %v834 = vrcp.pop %v811
          %v835 = vmul.f32 %v665, %v834
          %v836 = vrcp.pop %v812
          %v837 = vmul.f32 %v666, %v836
          %v838 = vrcp.pop %v813
          %v839 = vmul.f32 %v667, %v838
          %v840 = vrcp.pop %v814
          %v841 = vmul.f32 %v668, %v840
          %v842 = vrcp.pop %v815
          %v843 = vmul.f32 %v669, %v842
          %v844 = vrcp.pop %v816
          %v845 = vmul.f32 %v670, %v844
          %v846 = vrcp.pop %v817
          %v847 = vmul.f32 %v671, %v846
          %v848 = vrcp.pop %v818
          %v849 = vmul.f32 %v672, %v848
          %v850 = vrcp.pop %v819
          %v851 = vmul.f32 %v673, %v850
          %853 = vset.pattern.permute.xlu0 0
          %854 = vperm.xlu0 %853, %v821
          %v855 = vpop.permute.xlu0 %854
          %858 = vset.pattern.permute.xlu0 0
          %859 = vperm.xlu0 %858, %v823
          %v860 = vpop.permute.xlu0 %859
          %863 = vset.pattern.permute.xlu0 0
          %864 = vperm.xlu0 %863, %v825
          %v865 = vpop.permute.xlu0 %864
          %868 = vset.pattern.permute.xlu0 0
          %869 = vperm.xlu0 %868, %v827
          %v870 = vpop.permute.xlu0 %869
          %873 = vset.pattern.permute.xlu0 0
          %874 = vperm.xlu0 %873, %v829
          %v875 = vpop.permute.xlu0 %874
          %878 = vset.pattern.permute.xlu0 0
          %879 = vperm.xlu0 %878, %v831
          %v880 = vpop.permute.xlu0 %879
          %883 = vset.pattern.permute.xlu0 0
          %884 = vperm.xlu0 %883, %v833
          %v885 = vpop.permute.xlu0 %884
          %888 = vset.pattern.permute.xlu0 0
          %889 = vperm.xlu0 %888, %v835
          %v890 = vpop.permute.xlu0 %889
          %893 = vset.pattern.permute.xlu0 0
          %894 = vperm.xlu0 %893, %v837
          %v895 = vpop.permute.xlu0 %894
          %898 = vset.pattern.permute.xlu0 0
          %899 = vperm.xlu0 %898, %v839
          %v900 = vpop.permute.xlu0 %899
          %903 = vset.pattern.permute.xlu0 0
          %904 = vperm.xlu0 %903, %v841
          %v905 = vpop.permute.xlu0 %904
          %908 = vset.pattern.permute.xlu0 0
          %909 = vperm.xlu0 %908, %v843
          %v910 = vpop.permute.xlu0 %909
          %913 = vset.pattern.permute.xlu0 0
          %914 = vperm.xlu0 %913, %v845
          %v915 = vpop.permute.xlu0 %914
          %918 = vset.pattern.permute.xlu0 0
          %919 = vperm.xlu0 %918, %v847
          %v920 = vpop.permute.xlu0 %919
          %923 = vset.pattern.permute.xlu0 0
          %924 = vperm.xlu0 %923, %v849
          %v925 = vpop.permute.xlu0 %924
          %928 = vset.pattern.permute.xlu0 0
          %929 = vperm.xlu0 %928, %v851
          %v930 = vpop.permute.xlu0 %929
          %v932 = vmul.f32 %v756, %v855
          %v933 = vmul.f32 %v757, %v860
          %v934 = vmul.f32 %v758, %v865
          %v935 = vmul.f32 %v759, %v870
          %v936 = vmul.f32 %v760, %v875
          %v937 = vmul.f32 %v761, %v880
          %v938 = vmul.f32 %v762, %v885
          %v939 = vmul.f32 %v763, %v890
          %v940 = vmul.f32 %v764, %v895
          %v941 = vmul.f32 %v765, %v900
          %v942 = vmul.f32 %v766, %v905
          %v943 = vmul.f32 %v767, %v910
          %v944 = vmul.f32 %v768, %v915
          %v945 = vmul.f32 %v769, %v920
          %v946 = vmul.f32 %v770, %v925
          %v947 = vmul.f32 %v771, %v930
          %v948 = vadd.f32 %v932, %v933
          %v949 = vadd.f32 %v948, %v934
          %v950 = vadd.f32 %v949, %v935
          %v951 = vadd.f32 %v950, %v936
          %v952 = vadd.f32 %v951, %v937
          %v953 = vadd.f32 %v952, %v938
          %v954 = vadd.f32 %v953, %v939
          %v955 = vadd.f32 %v954, %v940
          %v956 = vadd.f32 %v955, %v941
          %v957 = vadd.f32 %v956, %v942
          %v958 = vadd.f32 %v957, %v943
          %v959 = vadd.f32 %v958, %v944
          %v960 = vadd.f32 %v959, %v945
          %v961 = vadd.f32 %v960, %v946
          %v962 = vadd.f32 %v961, %v947
          %v963 = vrot.slane %v962, 4
          %v964 = vadd.f32 %v962, %v963
          %v965 = vrot.slane %v964, 2
          %v966 = vadd.f32 %v964, %v965
          %v967 = vrot.slane %v966, 1
          %v968 = vadd.f32 %v966, %v967
          %v969 = vadd.f32 %v968, 1e-09
          %v970 = vmax.f32 %v969, 1e-09
          %v971 = vrcp.pop %v970
          %v972 = vmul.f32 %v674, %v971
          %v973 = vmin.f32 %v972, 1.0
          %v974 = vmul.f32 %v932, %v973
          %v975 = vmul.f32 %v933, %v973
          %v976 = vmul.f32 %v934, %v973
          %v977 = vmul.f32 %v935, %v973
          %v978 = vmul.f32 %v936, %v973
          %v979 = vmul.f32 %v937, %v973
          %v980 = vmul.f32 %v938, %v973
          %v981 = vmul.f32 %v939, %v973
          %v982 = vmul.f32 %v940, %v973
          %v983 = vmul.f32 %v941, %v973
          %v984 = vmul.f32 %v942, %v973
          %v985 = vmul.f32 %v943, %v973
          %v986 = vmul.f32 %v944, %v973
          %v987 = vmul.f32 %v945, %v973
          %v988 = vmul.f32 %v946, %v973
          %v989 = vmul.f32 %v947, %v973
          %v990 = vmul.f32 %v973, %v968
          %v991 = vmul.f32 %v546, %v974
          %v992 = vmul.f32 %v553, %v975
          %v993 = vmul.f32 %v560, %v976
          %v994 = vmul.f32 %v567, %v977
          %v995 = vmul.f32 %v574, %v978
          %v996 = vmul.f32 %v581, %v979
          %v997 = vmul.f32 %v588, %v980
          %v998 = vmul.f32 %v595, %v981
          %v999 = vmul.f32 %v602, %v982
          %v1000 = vmul.f32 %v609, %v983
          %v1001 = vmul.f32 %v616, %v984
          %v1002 = vmul.f32 %v623, %v985
          %v1003 = vmul.f32 %v630, %v986
          %v1004 = vmul.f32 %v637, %v987
          %v1005 = vmul.f32 %v644, %v988
          %v1006 = vmul.f32 %v651, %v989
          %1007 = vadd.xlane.f32.xlu0 %v991
          %v1008 = vpop.xlane.xlu0 %1007
          %1009 = vadd.xlane.f32.xlu0 %v992
          %v1010 = vpop.xlane.xlu0 %1009
          %1011 = vadd.xlane.f32.xlu0 %v993
          %v1012 = vpop.xlane.xlu0 %1011
          %1013 = vadd.xlane.f32.xlu0 %v994
          %v1014 = vpop.xlane.xlu0 %1013
          %1015 = vadd.xlane.f32.xlu0 %v995
          %v1016 = vpop.xlane.xlu0 %1015
          %1017 = vadd.xlane.f32.xlu0 %v996
          %v1018 = vpop.xlane.xlu0 %1017
          %1019 = vadd.xlane.f32.xlu0 %v997
          %v1020 = vpop.xlane.xlu0 %1019
          %1021 = vadd.xlane.f32.xlu0 %v998
          %v1022 = vpop.xlane.xlu0 %1021
          %1023 = vadd.xlane.f32.xlu0 %v999
          %v1024 = vpop.xlane.xlu0 %1023
          %1025 = vadd.xlane.f32.xlu0 %v1000
          %v1026 = vpop.xlane.xlu0 %1025
          %1027 = vadd.xlane.f32.xlu0 %v1001
          %v1028 = vpop.xlane.xlu0 %1027
          %1029 = vadd.xlane.f32.xlu0 %v1002
          %v1030 = vpop.xlane.xlu0 %1029
          %1031 = vadd.xlane.f32.xlu0 %v1003
          %v1032 = vpop.xlane.xlu0 %1031
          %1033 = vadd.xlane.f32.xlu0 %v1004
          %v1034 = vpop.xlane.xlu0 %1033
          %1035 = vadd.xlane.f32.xlu0 %v1005
          %v1036 = vpop.xlane.xlu0 %1035
          %1037 = vadd.xlane.f32.xlu0 %v1006
          %v1038 = vpop.xlane.xlu0 %1037
          %v1039 = vadd.f32 %v675, %v1008
          %v1040 = vadd.f32 %v676, %v1010
          %v1041 = vadd.f32 %v677, %v1012
          %v1042 = vadd.f32 %v678, %v1014
          %v1043 = vadd.f32 %v679, %v1016
          %v1044 = vadd.f32 %v680, %v1018
          %v1045 = vadd.f32 %v681, %v1020
          %v1046 = vadd.f32 %v682, %v1022
          %v1047 = vadd.f32 %v683, %v1024
          %v1048 = vadd.f32 %v684, %v1026
          %v1049 = vadd.f32 %v685, %v1028
          %v1050 = vadd.f32 %v686, %v1030
          %v1051 = vadd.f32 %v687, %v1032
          %v1052 = vadd.f32 %v688, %v1034
          %v1053 = vadd.f32 %v689, %v1036
          %v1054 = vadd.f32 %v690, %v1038
          %1055 = vxpose.xlu0.b32.start [1/16] %v990, 128
          %1056 = vxpose.xlu0.b32.cont [2/16] 0.0, 128
          %1057 = vxpose.xlu0.b32.cont [3/16] 0.0, 128
          %1058 = vxpose.xlu0.b32.cont [4/16] 0.0, 128
          %1059 = vxpose.xlu0.b32.cont [5/16] 0.0, 128
          %1060 = vxpose.xlu0.b32.cont [6/16] 0.0, 128
          %1061 = vxpose.xlu0.b32.cont [7/16] 0.0, 128
          %1062 = vxpose.xlu0.b32.cont [8/16] 0.0, 128
          %1063 = vxpose.xlu0.b32.cont [9/16] 0.0, 128
          %1064 = vxpose.xlu0.b32.cont [10/16] 0.0, 128
          %1065 = vxpose.xlu0.b32.cont [11/16] 0.0, 128
          %1066 = vxpose.xlu0.b32.cont [12/16] 0.0, 128
          %1067 = vxpose.xlu0.b32.cont [13/16] 0.0, 128
          %1068 = vxpose.xlu0.b32.cont [14/16] 0.0, 128
          %1069 = vxpose.xlu0.b32.cont [15/16] 0.0, 128
          %1070 = vxpose.xlu0.b32.end [16/16] 0.0, 128
          %v1071 = vpop.trf.xlu0
          %v1072 = vpop.trf.xlu0
          %v1073 = vpop.trf.xlu0
          %v1074 = vpop.trf.xlu0
          %v1075 = vpop.trf.xlu0
          %v1076 = vpop.trf.xlu0
          %v1077 = vpop.trf.xlu0
          %v1078 = vpop.trf.xlu0
          %v1079 = vpop.trf.xlu0
          %v1080 = vpop.trf.xlu0
          %v1081 = vpop.trf.xlu0
          %v1082 = vpop.trf.xlu0
          %v1083 = vpop.trf.xlu0
          %v1084 = vpop.trf.xlu0
          %v1085 = vpop.trf.xlu0
          %v1086 = vpop.trf.xlu0
          %v1087 = vsub.f32 %v658, %v1071
          %v1088 = vsub.f32 %v659, %v1072
          %v1089 = vsub.f32 %v660, %v1073
          %v1090 = vsub.f32 %v661, %v1074
          %v1091 = vsub.f32 %v662, %v1075
          %v1092 = vsub.f32 %v663, %v1076
          %v1093 = vsub.f32 %v664, %v1077
          %v1094 = vsub.f32 %v665, %v1078
          %v1095 = vsub.f32 %v666, %v1079
          %v1096 = vsub.f32 %v667, %v1080
          %v1097 = vsub.f32 %v668, %v1081
          %v1098 = vsub.f32 %v669, %v1082
          %v1099 = vsub.f32 %v670, %v1083
          %v1100 = vsub.f32 %v671, %v1084
          %v1101 = vsub.f32 %v672, %v1085
          %v1102 = vsub.f32 %v673, %v1086
          %v1103 = vmax.f32 %v1087, 0.0
          %v1104 = vmax.f32 %v1088, 0.0
          %v1105 = vmax.f32 %v1089, 0.0
          %v1106 = vmax.f32 %v1090, 0.0
          %v1107 = vmax.f32 %v1091, 0.0
          %v1108 = vmax.f32 %v1092, 0.0
          %v1109 = vmax.f32 %v1093, 0.0
          %v1110 = vmax.f32 %v1094, 0.0
          %v1111 = vmax.f32 %v1095, 0.0
          %v1112 = vmax.f32 %v1096, 0.0
          %v1113 = vmax.f32 %v1097, 0.0
          %v1114 = vmax.f32 %v1098, 0.0
          %v1115 = vmax.f32 %v1099, 0.0
          %v1116 = vmax.f32 %v1100, 0.0
          %v1117 = vmax.f32 %v1101, 0.0
          %v1118 = vmax.f32 %v1102, 0.0
          %v1119 = vsub.f32 %v674, %v990
          %v1120 = vmax.f32 %v1119, 0.0
          %v1121 = vmul.f32 %v691, 0.25
        $region33: #{tpu_custom_call.1} parent=27 // loop_footer
          %s657 = sadd.s32 1, %s653
        $region34: #{tpu_custom_call.1} parent=27 // loop_footer_branch
          %652 = sbr.rel target = $region30
        $region35: #{tpu_custom_call.1} parent=27 // loop_exit
          _
        %vm1122 = vcmask 1040384
        %v1123 = vsel %vm1122, %v674, 0.0
        %1124 = vadd.xlane.f32.xlu0 %v1123
        %v1125 = vpop.xlane.xlu0 %1124
        %v1126 = vrot.slane %v1125, 4
        %v1127 = vadd.f32 %v1125, %v1126
        %v1128 = vrot.slane %v1127, 2
        %v1129 = vadd.f32 %v1127, %v1128
        %v1130 = vrot.slane %v1129, 1
        %v1131 = vadd.f32 %v1129, %v1130
        %s1132 = vtos %v1131
        %v1133 = vstv %s1132
        %v1134 = vmax.f32 %v1133, 1e-09
        %vm1135 = vcmask 7168
        %v1136 = vsel %vm1135, %v658, 0.0
        %v1137 = vsel %vm1135, %v659, 0.0
        %v1138 = vadd.f32 %v1136, %v1137
        %v1139 = vsel %vm1135, %v660, 0.0
        %v1140 = vadd.f32 %v1138, %v1139
        %v1141 = vsel %vm1135, %v661, 0.0
        %v1142 = vadd.f32 %v1140, %v1141
        %v1143 = vsel %vm1135, %v662, 0.0
        %v1144 = vadd.f32 %v1142, %v1143
        %v1145 = vsel %vm1135, %v663, 0.0
        %v1146 = vadd.f32 %v1144, %v1145
        %v1147 = vsel %vm1135, %v664, 0.0
        %v1148 = vadd.f32 %v1146, %v1147
        %v1149 = vsel %vm1135, %v665, 0.0
        %v1150 = vadd.f32 %v1148, %v1149
        %v1151 = vsel %vm1135, %v666, 0.0
        %v1152 = vadd.f32 %v1150, %v1151
        %v1153 = vsel %vm1135, %v667, 0.0
        %v1154 = vadd.f32 %v1152, %v1153
        %v1155 = vsel %vm1135, %v668, 0.0
        %v1156 = vadd.f32 %v1154, %v1155
        %v1157 = vsel %vm1135, %v669, 0.0
        %v1158 = vadd.f32 %v1156, %v1157
        %v1159 = vsel %vm1135, %v670, 0.0
        %v1160 = vadd.f32 %v1158, %v1159
        %v1161 = vsel %vm1135, %v671, 0.0
        %v1162 = vadd.f32 %v1160, %v1161
        %v1163 = vsel %vm1135, %v672, 0.0
        %v1164 = vadd.f32 %v1162, %v1163
        %v1165 = vsel %vm1135, %v673, 0.0
        %v1166 = vadd.f32 %v1164, %v1165
        %1167 = vadd.xlane.f32.xlu0 %v1166
        %v1168 = vpop.xlane.xlu0 %1167
        %v1169 = vrot.slane %v1168, 4
        %v1170 = vadd.f32 %v1168, %v1169
        %v1171 = vrot.slane %v1170, 2
        %v1172 = vadd.f32 %v1170, %v1171
        %v1173 = vrot.slane %v1172, 1
        %v1174 = vadd.f32 %v1172, %v1173
        %s1175 = vtos %v1174
        %v1176 = vstv %s1175
        %v1177 = vrcp.pop %v1134
        %v1178 = vmul.f32 %v1176, %v1177
        %v1179 = vmul.f32 %v674, %v1178
        %v1180 = vadd.f32 %v1179, 1e-09
        %v1181 = vmax.f32 %v1180, 1e-09
        %v1182 = vrcp.pop %v1181
        %v1183 = vmul.f32 %v674, %v1182
        %v1184 = vmin.f32 %v1183, 1.0
        %v1185 = vmul.f32 %v674, %v1184
        %v1186 = vmul.f32 %v546, %v1185
        %v1187 = vmul.f32 %v553, %v1185
        %v1188 = vmul.f32 %v560, %v1185
        %v1189 = vmul.f32 %v567, %v1185
        %v1190 = vmul.f32 %v574, %v1185
        %v1191 = vmul.f32 %v581, %v1185
        %v1192 = vmul.f32 %v588, %v1185
        %v1193 = vmul.f32 %v595, %v1185
        %v1194 = vmul.f32 %v602, %v1185
        %v1195 = vmul.f32 %v609, %v1185
        %v1196 = vmul.f32 %v616, %v1185
        %v1197 = vmul.f32 %v623, %v1185
        %v1198 = vmul.f32 %v630, %v1185
        %v1199 = vmul.f32 %v637, %v1185
        %v1200 = vmul.f32 %v644, %v1185
        %v1201 = vmul.f32 %v651, %v1185
        %1202 = vadd.xlane.f32.xlu0 %v1186
        %v1203 = vpop.xlane.xlu0 %1202
        %1204 = vadd.xlane.f32.xlu0 %v1187
        %v1205 = vpop.xlane.xlu0 %1204
        %1206 = vadd.xlane.f32.xlu0 %v1188
        %v1207 = vpop.xlane.xlu0 %1206
        %1208 = vadd.xlane.f32.xlu0 %v1189
        %v1209 = vpop.xlane.xlu0 %1208
        %1210 = vadd.xlane.f32.xlu0 %v1190
        %v1211 = vpop.xlane.xlu0 %1210
        %1212 = vadd.xlane.f32.xlu0 %v1191
        %v1213 = vpop.xlane.xlu0 %1212
        %1214 = vadd.xlane.f32.xlu0 %v1192
        %v1215 = vpop.xlane.xlu0 %1214
        %1216 = vadd.xlane.f32.xlu0 %v1193
        %v1217 = vpop.xlane.xlu0 %1216
        %1218 = vadd.xlane.f32.xlu0 %v1194
        %v1219 = vpop.xlane.xlu0 %1218
        %1220 = vadd.xlane.f32.xlu0 %v1195
        %v1221 = vpop.xlane.xlu0 %1220
        %1222 = vadd.xlane.f32.xlu0 %v1196
        %v1223 = vpop.xlane.xlu0 %1222
        %1224 = vadd.xlane.f32.xlu0 %v1197
        %v1225 = vpop.xlane.xlu0 %1224
        %1226 = vadd.xlane.f32.xlu0 %v1198
        %v1227 = vpop.xlane.xlu0 %1226
        %1228 = vadd.xlane.f32.xlu0 %v1199
        %v1229 = vpop.xlane.xlu0 %1228
        %1230 = vadd.xlane.f32.xlu0 %v1200
        %v1231 = vpop.xlane.xlu0 %1230
        %1232 = vadd.xlane.f32.xlu0 %v1201
        %v1233 = vpop.xlane.xlu0 %1232
        %v1234 = vmul.f32 %v658, %v1177
        %v1235 = vmul.f32 %v659, %v1177
        %v1236 = vmul.f32 %v660, %v1177
        %v1237 = vmul.f32 %v661, %v1177
        %v1238 = vmul.f32 %v662, %v1177
        %v1239 = vmul.f32 %v663, %v1177
        %v1240 = vmul.f32 %v664, %v1177
        %v1241 = vmul.f32 %v665, %v1177
        %v1242 = vmul.f32 %v666, %v1177
        %v1243 = vmul.f32 %v667, %v1177
        %v1244 = vmul.f32 %v668, %v1177
        %v1245 = vmul.f32 %v669, %v1177
        %v1246 = vmul.f32 %v670, %v1177
        %v1247 = vmul.f32 %v671, %v1177
        %v1248 = vmul.f32 %v672, %v1177
        %v1249 = vmul.f32 %v673, %v1177
        %v1250 = vmul.f32 %v1234, %v1203
        %v1251 = vmul.f32 %v1235, %v1205
        %v1252 = vmul.f32 %v1236, %v1207
        %v1253 = vmul.f32 %v1237, %v1209
        %v1254 = vmul.f32 %v1238, %v1211
        %v1255 = vmul.f32 %v1239, %v1213
        %v1256 = vmul.f32 %v1240, %v1215
        %v1257 = vmul.f32 %v1241, %v1217
        %v1258 = vmul.f32 %v1242, %v1219
        %v1259 = vmul.f32 %v1243, %v1221
        %v1260 = vmul.f32 %v1244, %v1223
        %v1261 = vmul.f32 %v1245, %v1225
        %v1262 = vmul.f32 %v1246, %v1227
        %v1263 = vmul.f32 %v1247, %v1229
        %v1264 = vmul.f32 %v1248, %v1231
        %v1265 = vmul.f32 %v1249, %v1233
        %v1266 = vadd.f32 %v675, %v1250
        %v1267 = vadd.f32 %v676, %v1251
        %v1268 = vadd.f32 %v677, %v1252
        %v1269 = vadd.f32 %v678, %v1253
        %v1270 = vadd.f32 %v679, %v1254
        %v1271 = vadd.f32 %v680, %v1255
        %v1272 = vadd.f32 %v681, %v1256
        %v1273 = vadd.f32 %v682, %v1257
        %v1274 = vadd.f32 %v683, %v1258
        %v1275 = vadd.f32 %v684, %v1259
        %v1276 = vadd.f32 %v685, %v1260
        %v1277 = vadd.f32 %v686, %v1261
        %v1278 = vadd.f32 %v687, %v1262
        %v1279 = vadd.f32 %v688, %v1263
        %v1280 = vadd.f32 %v689, %v1264
        %v1281 = vadd.f32 %v690, %v1265
        %v1282 = vsel %vm1135, %v1266, 0.0
        %v1283 = vsel %vm1135, %v1267, 0.0
        %v1284 = vadd.f32 %v1282, %v1283
        %v1285 = vsel %vm1135, %v1268, 0.0
        %v1286 = vadd.f32 %v1284, %v1285
        %v1287 = vsel %vm1135, %v1269, 0.0
        %v1288 = vadd.f32 %v1286, %v1287
        %v1289 = vsel %vm1135, %v1270, 0.0
        %v1290 = vadd.f32 %v1288, %v1289
        %v1291 = vsel %vm1135, %v1271, 0.0
        %v1292 = vadd.f32 %v1290, %v1291
        %v1293 = vsel %vm1135, %v1272, 0.0
        %v1294 = vadd.f32 %v1292, %v1293
        %v1295 = vsel %vm1135, %v1273, 0.0
        %v1296 = vadd.f32 %v1294, %v1295
        %v1297 = vsel %vm1135, %v1274, 0.0
        %v1298 = vadd.f32 %v1296, %v1297
        %v1299 = vsel %vm1135, %v1275, 0.0
        %v1300 = vadd.f32 %v1298, %v1299
        %v1301 = vsel %vm1135, %v1276, 0.0
        %v1302 = vadd.f32 %v1300, %v1301
        %v1303 = vsel %vm1135, %v1277, 0.0
        %v1304 = vadd.f32 %v1302, %v1303
        %v1305 = vsel %vm1135, %v1278, 0.0
        %v1306 = vadd.f32 %v1304, %v1305
        %v1307 = vsel %vm1135, %v1279, 0.0
        %v1308 = vadd.f32 %v1306, %v1307
        %v1309 = vsel %vm1135, %v1280, 0.0
        %v1310 = vadd.f32 %v1308, %v1309
        %v1311 = vsel %vm1135, %v1281, 0.0
        %v1312 = vadd.f32 %v1310, %v1311
        %1313 = vadd.xlane.f32.xlu0 %v1312
        %v1314 = vpop.xlane.xlu0 %1313
        %v1315 = vrot.slane %v1314, 4
        %v1316 = vadd.f32 %v1314, %v1315
        %v1317 = vrot.slane %v1316, 2
        %v1318 = vadd.f32 %v1316, %v1317
        %v1319 = vrot.slane %v1318, 1
        %v1320 = vadd.f32 %v1318, %v1319
        %s1321 = vtos %v1320
        %s1322 = scalar_lea.smem %s149, 0 [#allocation2]
        %1323 = sst [smem:[%s1322]] %s1321
        %s1324 = sand.u32 %s76, 1
        %s1325 = scalar_lea.sflag [#allocation3], %s1324
        %s1326 = sand.u32 %s76, 1
        %s1327 = smul.addr %s1326, 128
        %s1328 = scalar_lea.smem [#allocation2], %s1327
        // Predicated region
        $region36: #{tpu_custom_call.1} parent=27 // pred_check
          %p1329 = pneg %p86
        $region37: #{tpu_custom_call.1} parent=27 // pred_check_branch
          %1331 = sbr.rel (%p1329) target = $region39
        $region38: #{tpu_custom_call.1} parent=27 // pred_region
          %s1333 = ssub.s32 16, 16
          %1334 = vsyncadd %s1325, %s1333
          %s1335 = scalar_lea.vmem %s2, %s16
          %s1337 = sshll.u32 %s1335, 4
          %s1338 = int_to_ptr.vmem [resolvable:$true] %s1337
          %1340 = dma.smem_to_vmem %s1328, 16, %s1338, %s1325
        $region39: #{tpu_custom_call.1} parent=27 // pred_fallthru
          _
      $region28: #{tpu_custom_call.1} parent=5 // pred_fallthru
        _
      %p1341 = scmp.le.s32.totalorder 2, %s11
      // Predicated region
      $region40: #{tpu_custom_call.1} parent=5 // pred_check
        %p1342 = pneg %p1341
      $region41: #{tpu_custom_call.1} parent=5 // pred_check_branch
        %1344 = sbr.rel (%p1342) target = $region43
      $region42: #{tpu_custom_call.1} parent=5 // pred_region
        %s1345 = ssub.s32 %s11, 2
        // Predicated region
        $region44: #{tpu_custom_call.1} parent=42 // pred_check
          %p1346 = pneg %p92
        $region45: #{tpu_custom_call.1} parent=42 // pred_check_branch
          %1348 = sbr.rel (%p1346) target = $region47
        $region46: #{tpu_custom_call.1} parent=42 // pred_region
          %s1349 = sand.u32 %s77, 1
          %s1350 = scalar_lea.sflag [#allocation3], %s1349
          %s1351 = sand.u32 %s77, 1
          %s1352 = smul.addr %s1351, 128
          %s1353 = scalar_lea.smem [#allocation2], %s1352
          %1354 = dma.done %s1350, 16
        $region47: #{tpu_custom_call.1} parent=42 // pred_fallthru
          _
        %1355 = sfence
      $region43: #{tpu_custom_call.1} parent=5 // pred_fallthru
        _
    $region6: #{tpu_custom_call.1} parent=1 // loop_footer
      %s15 = sadd.s32 1, %s11
    $region7: #{tpu_custom_call.1} parent=1 // loop_footer_branch
      %10 = sbr.rel target = $region3
    $region8: #{tpu_custom_call.1} parent=1 // loop_exit
      _
    %1356 = vsyncpa [#allocation3], 1
    %s1357 = scalar_lea.sflag [#allocation3], 1
    %1358 = vsyncpa %s1357, 1

</llo_original>
